<compile_context>
chip_gen: v7x
topology: tpu7x:2x2x1
jax: 0.10.0
libtpu: 0.0.40
codegen_flags: <defaults>
</compile_context>

<pallas_src>
import jax
import jax.numpy as jnp
from jax import lax
from jax.experimental import pallas as pl
from jax.experimental.pallas import tpu as pltpu

B = 8                  # batch
L = 11                 # input length (wine features)
C1, C2 = 16, 32
K = 3
L1 = L - (K - 1)       # 9
L2 = L1 - (K - 1)      # 7
H1, NCLS = 64, 10
OUT_PAD = 128          # lane-dense padded output width (>= NCLS, multiple of 128)


def wine_cnn_kernel(x_ref, w1_ref, b1_ref, w2_ref, b2_ref,
                    wf1_ref, bf1_ref, wf2_ref, bf2_ref, out_ref):
    # x:   (B, 11)
    # w1:  (11, 144)  banded conv1 weight     b1: (1, 144)
    # w2:  (144, 224) block-Toeplitz conv2    b2: (1, 224)
    # wf1: (224, 64)  position-major fc1      bf1:(1, 64)
    # wf2: (64, 128)  zero-padded fc2         bf2:(1, 128)
    x = x_ref[...]

    # conv1 + ReLU as one (8,11)@(11,144) matmul -> position-major (p*16+c) slab
    h1 = jax.nn.relu(
        jnp.dot(x, w1_ref[...], preferred_element_type=jnp.float32) + b1_ref[...])

    # conv2 + ReLU as one (8,144)@(144,224) matmul -> position-major (l*32+c) slab
    h2 = jax.nn.relu(
        jnp.dot(h1, w2_ref[...], preferred_element_type=jnp.float32) + b2_ref[...])

    # fc1 + ReLU as one (8,224)@(224,64) matmul
    z = jax.nn.relu(
        jnp.dot(h2, wf1_ref[...], preferred_element_type=jnp.float32) + bf1_ref[...])
    # TODO(synk): Dropout(0.2) is identity in eval mode; training-mode RNG mask not implemented.

    # fc2 into a lane-dense (8,128) slab (cols >= 10 are zero-padded weights)
    out_ref[...] = (
        jnp.dot(z, wf2_ref[...], preferred_element_type=jnp.float32) + bf2_ref[...])


def wine_cnn_forward(x_ncl, params):
    """x_ncl: (B, 1, 11) float32, PyTorch NCL layout. Returns (B, 10)."""
    w1, b1, w2, b2, wf1, bf1, wf2, bf2 = params
    assert x_ncl.shape == (B, 1, L)

    # ---- glue: one-time parameter re-layout (no per-step compute in kernel) ----
    x2d = x_ncl[:, 0, :]                                  # (B, 11)

    # Banded conv1 weight: W1_band[p+k, p*C1+c] = w1[c, 0, k]
    p_i, k_i, c_i = jnp.meshgrid(jnp.arange(L1), jnp.arange(K), jnp.arange(C1),
                                 indexing='ij')
    rows1 = (p_i + k_i).reshape(-1)
    cols1 = (p_i * C1 + c_i).reshape(-1)
    vals1 = w1[c_i, 0, k_i].reshape(-1)
    w1_band = jnp.zeros((L, L1 * C1), jnp.float32).at[rows1, cols1].set(vals1)
    b1_band = jnp.tile(b1, L1).reshape(1, L1 * C1)        # bias per (p, c)

    # Block-Toeplitz conv2 weight: W2_band[(l+k)*C1+ci, l*C2+o] = w2[o, ci, k]
    l_i, k_i, ci_i, o_i = jnp.meshgrid(jnp.arange(L2), jnp.arange(K),
                                       jnp.arange(C1), jnp.arange(C2),
                                       indexing='ij')
    rows2 = ((l_i + k_i) * C1 + ci_i).reshape(-1)
    cols2 = (l_i * C2 + o_i).reshape(-1)
    vals2 = w2[o_i, ci_i, k_i].reshape(-1)
    w2_band = jnp.zeros((L1 * C1, L2 * C2), jnp.float32).at[rows2, cols2].set(vals2)
    b2_band = jnp.tile(b2, L2).reshape(1, L2 * C2)

    # fc1 weight (64, 224), PyTorch flatten index c*7+l  ->  position-major l*32+c
    wf1_pm = jnp.transpose(wf1.reshape(H1, C2, L2), (2, 1, 0)).reshape(L2 * C2, H1)
    bf1r = bf1.reshape(1, H1)

    # fc2, zero-padded to 128 output lanes (lane-dense store; slice outside kernel)
    wf2_pad = jnp.zeros((H1, OUT_PAD), jnp.float32).at[:, :NCLS].set(wf2.T)
    bf2_pad = jnp.zeros((1, OUT_PAD), jnp.float32).at[:, :NCLS].set(bf2.reshape(1, NCLS))

    vmem = pl.BlockSpec(memory_space=pltpu.MemorySpace.VMEM)
    out_padded = pl.pallas_call(
        wine_cnn_kernel,
        out_shape=jax.ShapeDtypeStruct((B, OUT_PAD), jnp.float32),
        in_specs=[vmem] * 9,
        out_specs=vmem,
    )(x2d, w1_band, b1_band, w2_band, b2_band, wf1_pm, bf1r, wf2_pad, bf2_pad)
    return out_padded[:, :NCLS]


def ref_forward(x_ncl, params):
    """Pure-JAX reference mirroring the PyTorch module (eval mode)."""
    w1, b1, w2, b2, wf1, bf1, wf2, bf2 = params
    dn = ('NCW', 'OIW', 'NCW')
    hp = jax.lax.Precision.HIGHEST
    h1 = jax.nn.relu(lax.conv_general_dilated(x_ncl, w1, (1,), 'VALID',
                                              dimension_numbers=dn,
                                              precision=hp) + b1[None, :, None])
    h2 = jax.nn.relu(lax.conv_general_dilated(h1, w2, (1,), 'VALID',
                                              dimension_numbers=dn,
                                              precision=hp) + b2[None, :, None])
    flat = h2.reshape(B, -1)                              # (B, 224), channel-major
    z = jax.nn.relu(jnp.dot(flat, wf1.T, precision=hp) + bf1)
    return jnp.dot(z, wf2.T, precision=hp) + bf2


def init_params(key):
    ks = jax.random.split(key, 8)

    def u(k, shape, fan_in):
        bound = 1.0 / jnp.sqrt(fan_in)
        return jax.random.uniform(k, shape, jnp.float32, -bound, bound)

    w1 = u(ks[0], (C1, 1, K), 1 * K)          # conv1.weight
    b1 = u(ks[1], (C1,), 1 * K)               # conv1.bias
    w2 = u(ks[2], (C2, C1, K), C1 * K)        # conv2.weight
    b2 = u(ks[3], (C2,), C1 * K)              # conv2.bias
    wf1 = u(ks[4], (H1, C2 * L2), C2 * L2)    # fc1.weight
    bf1 = u(ks[5], (H1,), C2 * L2)            # fc1.bias
    wf2 = u(ks[6], (NCLS, H1), H1)            # fc2.weight
    bf2 = u(ks[7], (NCLS,), H1)               # fc2.bias
    return (w1, b1, w2, b2, wf1, bf1, wf2, bf2)


if __name__ == "__main__":
    key = jax.random.PRNGKey(0)
    kx, kp = jax.random.split(key)
    x = jax.random.normal(kx, (B, 1, L), jnp.float32)
    params = init_params(kp)

    out = jax.block_until_ready(wine_cnn_forward(x, params))
    ref = jax.block_until_ready(ref_forward(x, params))

    assert out.shape == (B, NCLS)
    assert jnp.allclose(out, ref, rtol=1e-3, atol=1e-3), (
        f"max abs err = {jnp.max(jnp.abs(out - ref))}")
    print("KERNEL_OK")
</pallas_src>

<mosaic_0001>
module attributes {stable_mosaic.version = 11 : i64} {
  func.func @wine_cnn_kernel(%arg0: memref<8x11xf32, #tpu.memory_space<vmem>>, %arg1: memref<11x144xf32, #tpu.memory_space<vmem>>, %arg2: memref<1x144xf32, #tpu.memory_space<vmem>>, %arg3: memref<144x224xf32, #tpu.memory_space<vmem>>, %arg4: memref<1x224xf32, #tpu.memory_space<vmem>>, %arg5: memref<224x64xf32, #tpu.memory_space<vmem>>, %arg6: memref<1x64xf32, #tpu.memory_space<vmem>>, %arg7: memref<64x128xf32, #tpu.memory_space<vmem>>, %arg8: memref<1x128xf32, #tpu.memory_space<vmem>>, %arg9: memref<8x128xf32, #tpu.memory_space<vmem>>) attributes {dimension_semantics = [], scalar_prefetch = 0 : i64, scratch_operands = 0 : i64, tpu.core_type = #tpu.core_type<tc>} {
    %c0 = arith.constant 0 : index
    %c0_0 = arith.constant 0 : index
    %0 = vector.load %arg0[%c0, %c0_0] : memref<8x11xf32, #tpu.memory_space<vmem>>, vector<8x11xf32>
    %c0_1 = arith.constant 0 : index
    %c0_2 = arith.constant 0 : index
    %1 = vector.load %arg1[%c0_1, %c0_2] : memref<11x144xf32, #tpu.memory_space<vmem>>, vector<11x144xf32>
    %cst = arith.constant dense<0.000000e+00> : vector<8x144xf32>
    %2 = tpu.matmul %0, %1, %cst {dimension_numbers = #tpu.dot_dimension_numbers<[1], [0], [0], [1], [0, 0, 1, 1], [], []>} : vector<8x11xf32>, vector<11x144xf32>, vector<8x144xf32> -> vector<8x144xf32>
    %c0_3 = arith.constant 0 : index
    %c0_4 = arith.constant 0 : index
    %3 = vector.load %arg2[%c0_3, %c0_4] : memref<1x144xf32, #tpu.memory_space<vmem>>, vector<1x144xf32>
    %4 = vector.broadcast %3 : vector<1x144xf32> to vector<8x144xf32>
    %5 = arith.addf %2, %4 : vector<8x144xf32>
    %cst_5 = arith.constant 0.000000e+00 : f32
    %6 = vector.broadcast %cst_5 : f32 to vector<8x144xf32>
    %7 = arith.maximumf %5, %6 : vector<8x144xf32>
    %c0_6 = arith.constant 0 : index
    %c0_7 = arith.constant 0 : index
    %8 = vector.load %arg3[%c0_6, %c0_7] : memref<144x224xf32, #tpu.memory_space<vmem>>, vector<144x224xf32>
    %cst_8 = arith.constant dense<0.000000e+00> : vector<8x224xf32>
    %9 = tpu.matmul %7, %8, %cst_8 {dimension_numbers = #tpu.dot_dimension_numbers<[1], [0], [0], [1], [0, 0, 1, 1], [], []>} : vector<8x144xf32>, vector<144x224xf32>, vector<8x224xf32> -> vector<8x224xf32>
    %c0_9 = arith.constant 0 : index
    %c0_10 = arith.constant 0 : index
    %10 = vector.load %arg4[%c0_9, %c0_10] : memref<1x224xf32, #tpu.memory_space<vmem>>, vector<1x224xf32>
    %11 = vector.broadcast %10 : vector<1x224xf32> to vector<8x224xf32>
    %12 = arith.addf %9, %11 : vector<8x224xf32>
    %cst_11 = arith.constant 0.000000e+00 : f32
    %13 = vector.broadcast %cst_11 : f32 to vector<8x224xf32>
    %14 = arith.maximumf %12, %13 : vector<8x224xf32>
    %c0_12 = arith.constant 0 : index
    %c0_13 = arith.constant 0 : index
    %15 = vector.load %arg5[%c0_12, %c0_13] : memref<224x64xf32, #tpu.memory_space<vmem>>, vector<224x64xf32>
    %cst_14 = arith.constant dense<0.000000e+00> : vector<8x64xf32>
    %16 = tpu.matmul %14, %15, %cst_14 {dimension_numbers = #tpu.dot_dimension_numbers<[1], [0], [0], [1], [0, 0, 1, 1], [], []>} : vector<8x224xf32>, vector<224x64xf32>, vector<8x64xf32> -> vector<8x64xf32>
    %c0_15 = arith.constant 0 : index
    %c0_16 = arith.constant 0 : index
    %17 = vector.load %arg6[%c0_15, %c0_16] : memref<1x64xf32, #tpu.memory_space<vmem>>, vector<1x64xf32>
    %18 = vector.broadcast %17 : vector<1x64xf32> to vector<8x64xf32>
    %19 = arith.addf %16, %18 : vector<8x64xf32>
    %cst_17 = arith.constant 0.000000e+00 : f32
    %20 = vector.broadcast %cst_17 : f32 to vector<8x64xf32>
    %21 = arith.maximumf %19, %20 : vector<8x64xf32>
    %c0_18 = arith.constant 0 : index
    %c0_19 = arith.constant 0 : index
    %22 = vector.load %arg7[%c0_18, %c0_19] : memref<64x128xf32, #tpu.memory_space<vmem>>, vector<64x128xf32>
    %cst_20 = arith.constant dense<0.000000e+00> : vector<8x128xf32>
    %23 = tpu.matmul %21, %22, %cst_20 {dimension_numbers = #tpu.dot_dimension_numbers<[1], [0], [0], [1], [0, 0, 1, 1], [], []>} : vector<8x64xf32>, vector<64x128xf32>, vector<8x128xf32> -> vector<8x128xf32>
    %c0_21 = arith.constant 0 : index
    %c0_22 = arith.constant 0 : index
    %24 = vector.load %arg8[%c0_21, %c0_22] : memref<1x128xf32, #tpu.memory_space<vmem>>, vector<1x128xf32>
    %25 = vector.broadcast %24 : vector<1x128xf32> to vector<8x128xf32>
    %26 = arith.addf %23, %25 : vector<8x128xf32>
    %c0_23 = arith.constant 0 : index
    %c0_24 = arith.constant 0 : index
    %27 = vector.load %arg9[%c0_23, %c0_24] : memref<8x128xf32, #tpu.memory_space<vmem>>, vector<8x128xf32>
    tpu.vector_store %arg9[%c0_23, %c0_24], %26 {strides = array<i32>} : memref<8x128xf32, #tpu.memory_space<vmem>>, vector<8x128xf32>,
    return
  }
}

</mosaic_0001>

<llo_original>
// kernel: tpu_custom_call.1
$region0: #{tpu_custom_call.1}
  #allocation0 [shape = 'u32[]', space=smem, size = 0x4, offset = 0x4, fixed_abs, tag = 'smem constant byte address 0x4 - core index']
  #allocation1 [shape = 'u32[144,128]{1,0:T(1,128)}', space=vmem, size = 0x12000, scoped, tag = 'internal scratch']
  %s0 = inlined_call_operand.vmem [shape: f32[8,11], index: 0, kind: input, shape index: {}]
  %s1 = inlined_call_operand.hbm [shape: f32[11,144], index: 1, kind: input, shape index: {}]
  %s2 = inlined_call_operand.vmem [shape: f32[1,144], index: 2, kind: input, shape index: {}]
  %s3 = inlined_call_operand.vmem [shape: f32[144,224], index: 3, kind: input, shape index: {}]
  %s4 = inlined_call_operand.vmem [shape: f32[1,224], index: 4, kind: input, shape index: {}]
  %s5 = inlined_call_operand.vmem [shape: f32[224,64], index: 5, kind: input, shape index: {}]
  %s6 = inlined_call_operand.vmem [shape: f32[1,64], index: 6, kind: input, shape index: {}]
  %s7 = inlined_call_operand.vmem [shape: f32[64,128], index: 7, kind: input, shape index: {}]
  %s8 = inlined_call_operand.vmem [shape: f32[1,128], index: 8, kind: input, shape index: {}]
  %s9 = inlined_call_operand.hbm [shape: f32[8,128], index: 9, kind: output, shape index: {}]
  %s10 = sld [smem:[#allocation0]]
  $region50: #{tpu_custom_call.1} parent=0
    _
  %s12 = ssub.s32 1, %s10
  %s13 = scalar_select 0, %s12, %s10
  $region1: #{tpu_custom_call.1} parent=0
    #allocation2 [shape = 'u8[16384]{0}', space=vmem, size = 0x4000, scoped, tag = 'input window, operand 1, single buffered']
    #allocation3 [shape = 's32[1]{0}', space=sflag, size = 0x4, scoped, tag = 'scoped memory for tpu_custom_call.1']
    #allocation4 [shape = 's32[1]{0}', space=sflag, size = 0x4, scoped, tag = 'scoped memory for tpu_custom_call.1']
    #allocation5 [shape = 'u8[4096]{0}', space=vmem, size = 0x1000, scoped, tag = 'output window, operand 0, single buffered']
    %14 = vsyncpa [#allocation3], 0
    %15 = vsyncpa [#allocation4], 0
    // Predicated region
    $region2: #{tpu_custom_call.1} parent=1 // pred_check
      _
    $region3: #{tpu_custom_call.1} parent=1 // pred_check_branch
      %17 = sbr.rel (0) target = $region5
    $region4: #{tpu_custom_call.1} parent=1 // pred_region
      _
    $region5: #{tpu_custom_call.1} parent=1 // pred_fallthru
      _
    // Predicated region
    $region6: #{tpu_custom_call.1} parent=1 // pred_check
      _
    $region7: #{tpu_custom_call.1} parent=1 // pred_check_branch
      %19 = sbr.rel (0) target = $region9
    $region8: #{tpu_custom_call.1} parent=1 // pred_region
      %s21 = ssub.s32 512, 512
      %22 = vsyncadd [#allocation3], %s21
      %s23 = sshll.u32 [#allocation2], 4
      %s24 = int_to_ptr.vmem [resolvable:$true] %s23
      %29 = dma.hbm_to_vmem [thread:$0]  %s1, 512, %s24, [#allocation3], 256, 256, 16
    $region9: #{tpu_custom_call.1} parent=1 // pred_fallthru
      _
    // Predicated region
    $region10: #{tpu_custom_call.1} parent=1 // pred_check
      _
    $region11: #{tpu_custom_call.1} parent=1 // pred_check_branch
      %31 = sbr.rel (0) target = $region13
    $region12: #{tpu_custom_call.1} parent=1 // pred_region
      _
    $region13: #{tpu_custom_call.1} parent=1 // pred_fallthru
      _
    // Predicated region
    $region14: #{tpu_custom_call.1} parent=1 // pred_check
      _
    $region15: #{tpu_custom_call.1} parent=1 // pred_check_branch
      %33 = sbr.rel (0) target = $region17
    $region16: #{tpu_custom_call.1} parent=1 // pred_region
      _
    $region17: #{tpu_custom_call.1} parent=1 // pred_fallthru
      _
    // Predicated region
    $region18: #{tpu_custom_call.1} parent=1 // pred_check
      _
    $region19: #{tpu_custom_call.1} parent=1 // pred_check_branch
      %35 = sbr.rel (0) target = $region21
    $region20: #{tpu_custom_call.1} parent=1 // pred_region
      _
    $region21: #{tpu_custom_call.1} parent=1 // pred_fallthru
      _
    // Predicated region
    $region22: #{tpu_custom_call.1} parent=1 // pred_check
      _
    $region23: #{tpu_custom_call.1} parent=1 // pred_check_branch
      %37 = sbr.rel (0) target = $region25
    $region24: #{tpu_custom_call.1} parent=1 // pred_region
      _
    $region25: #{tpu_custom_call.1} parent=1 // pred_fallthru
      _
    // Predicated region
    $region26: #{tpu_custom_call.1} parent=1 // pred_check
      _
    $region27: #{tpu_custom_call.1} parent=1 // pred_check_branch
      %39 = sbr.rel (0) target = $region29
    $region28: #{tpu_custom_call.1} parent=1 // pred_region
      _
    $region29: #{tpu_custom_call.1} parent=1 // pred_fallthru
      _
    // Predicated region
    $region30: #{tpu_custom_call.1} parent=1 // pred_check
      _
    $region31: #{tpu_custom_call.1} parent=1 // pred_check_branch
      %41 = sbr.rel (0) target = $region33
    $region32: #{tpu_custom_call.1} parent=1 // pred_region
      _
    $region33: #{tpu_custom_call.1} parent=1 // pred_fallthru
      _
    // Predicated region
    $region34: #{tpu_custom_call.1} parent=1 // pred_check
      _
    $region35: #{tpu_custom_call.1} parent=1 // pred_check_branch
      %43 = sbr.rel (0) target = $region37
    $region36: #{tpu_custom_call.1} parent=1 // pred_region
      _
    $region37: #{tpu_custom_call.1} parent=1 // pred_fallthru
      _
    // Predicated region
    $region38: #{tpu_custom_call.1} parent=1 // pred_check
      _
    $region39: #{tpu_custom_call.1} parent=1 // pred_check_branch
      %45 = sbr.rel (0) target = $region41
    $region40: #{tpu_custom_call.1} parent=1 // pred_region
      %46 = dma.done [#allocation3], 512
    $region41: #{tpu_custom_call.1} parent=1 // pred_fallthru
      _
    %v47 = vld [vmem:[%s0] sm:$0xff]
    %v48 = vld [vmem:[#allocation2] sm:$0xff]
    %v49 = vld [vmem:[#allocation2 + $0x8] sm:$0xff]
    %v50 = vld [vmem:[#allocation2 + $0x10] sm:$0x7]
    %v51 = vld [vmem:[#allocation2 + $0x18] sm:$0x7]
    %v52 = vld [vmem:[%s2] sm:$0x3]
    %v54 = vlaneseq
    %v55 = vshrl.u32 %v54, 7
    %v56 = vsub.s32 0, %v55
    %v57 = vrot.slane %v52, %v56
    %v58 = vlaneseq
    %v59 = vshrl.u32 %v58, 7
    %v60 = vsub.s32 1, %v59
    %v61 = vrot.slane %v52, %v60
    %vm64 = vcmask 89088
    %v66 = vsel %vm64, %v47, 0
    %vm68 = vcmask 1042432
    %v70 = vsel %vm68, %v50, 0
    %v73 = vsel %vm68, %v51, 0
    %75 = vmatprep.subr.mxu0 %v49
    %76 = vmatpush1.msra.mxu0 %v48
    %77 = vmatprep.subr.mxu0 %v73
    %78 = vmatpush1.msra.mxu0 %v70
    %79 = vmatprep.subr.mxu0 0.0
    %80 = vmatpush1.msra.mxu0 0.0
    %81 = vmatprep.subr.mxu0 0.0
    %82 = vmatpush1.msra.mxu0 0.0
    %83 = vmatprep.subr.mxu0 0.0
    %84 = vmatpush1.msra.mxu0 0.0
    %85 = vmatprep.subr.mxu0 0.0
    %86 = vmatpush1.msra.mxu0 0.0
    %87 = vmatprep.subr.mxu0 0.0
    %88 = vmatpush1.msra.mxu0 0.0
    %89 = vmatprep.subr.mxu0 0.0
    %90 = vmatpush1.msra.mxu0 0.0
    %91 = vmatprep.subr.mxu0 0.0
    %92 = vmatpush1.msra.mxu0 0.0
    %93 = vmatprep.subr.mxu0 0.0
    %94 = vmatpush1.msra.mxu0 0.0
    %95 = vmatprep.subr.mxu0 0.0
    %96 = vmatpush1.msra.mxu0 0.0
    %97 = vmatprep.subr.mxu0 0.0
    %98 = vmatpush1.msra.mxu0 0.0
    %99 = vmatprep.subr.mxu0 0.0
    %100 = vmatpush1.msra.mxu0 0.0
    %101 = vmatprep.subr.mxu0 0.0
    %102 = vmatpush1.msra.mxu0 0.0
    %103 = vmatprep.subr.mxu0 0.0
    %104 = vmatpush1.msra.mxu0 0.0
    %105 = vmatprep.subr.mxu0 0.0
    %106 = vmatpush1.msra.mxu0 0.0
    %107 = vmatprep.subr.mxu0 0.0
    %108 = vmatpush1.msra.mxu0 0.0
    %109 = vmatprep.subr.mxu0 0.0
    %110 = vmatpush1.msra.mxu0 0.0
    %111 = vmatprep.subr.mxu0 0.0
    %112 = vmatpush1.msra.mxu0 0.0
    %113 = vmatprep.subr.mxu0 0.0
    %114 = vmatpush1.msra.mxu0 0.0
    %115 = vmatprep.subr.mxu0 0.0
    %116 = vmatpush1.msra.mxu0 0.0
    %117 = vmatprep.subr.mxu0 0.0
    %118 = vmatpush1.msra.mxu0 0.0
    %119 = vmatprep.subr.mxu0 0.0
    %120 = vmatpush1.msra.mxu0 0.0
    %121 = vmatprep.subr.mxu0 0.0
    %122 = vmatpush1.msra.mxu0 0.0
    %123 = vmatprep.subr.mxu0 0.0
    %124 = vmatpush1.msra.mxu0 0.0
    %125 = vmatprep.subr.mxu0 0.0
    %126 = vmatpush1.msra.mxu0 0.0
    %127 = vmatprep.subr.mxu0 0.0
    %128 = vmatpush1.msra.mxu0 0.0
    %129 = vmatprep.subr.mxu0 0.0
    %130 = vmatpush1.msra.mxu0 0.0
    %131 = vmatprep.subr.mxu0 0.0
    %132 = vmatpush1.msra.mxu0 0.0
    %133 = vmatprep.subr.mxu0 0.0
    %134 = vmatpush1.msra.mxu0 0.0
    %135 = vmatprep.subr.mxu0 0.0
    %136 = vmatpush1.msra.mxu0 0.0
    %137 = vmatprep.subr.mxu0 0.0
    %138 = vmatpush1.msra.mxu0 0.0
    %139 = vmatprep.mubr.f32.mxu0 0.0
    %140 = vmatmul.mubr.f32.gmra.mrb[0].mxu0 %v66
    %v141 = vpop.f32.mrb[0].mxu0
    %v142 = vadd.f32 %v57, %v141
    %v143 = vpop.f32.mrb[0].mxu0
    %v144 = vadd.f32 %v61, %v143
    %145 = vdwg.mxu0
    %v146 = vmax.f32 %v142, 0.0
    %v147 = vmax.f32 %v144, 0.0
    %v148 = vld [vmem:[%s3] sm:$0xff]
    %v149 = vld [vmem:[%s3 + $0x8] sm:$0xff]
    %v150 = vld [vmem:[%s3 + $0x10] sm:$0xff]
    %v151 = vld [vmem:[%s3 + $0x18] sm:$0xff]
    %v152 = vld [vmem:[%s3 + $0x20] sm:$0xff]
    %v153 = vld [vmem:[%s3 + $0x28] sm:$0xff]
    %v154 = vld [vmem:[%s3 + $0x30] sm:$0xff]
    %v155 = vld [vmem:[%s3 + $0x38] sm:$0xff]
    %v156 = vld [vmem:[%s3 + $0x40] sm:$0xff]
    %v157 = vld [vmem:[%s3 + $0x48] sm:$0xff]
    %v158 = vld [vmem:[%s3 + $0x50] sm:$0xff]
    %v159 = vld [vmem:[%s3 + $0x58] sm:$0xff]
    %v160 = vld [vmem:[%s3 + $0x60] sm:$0xff]
    %v161 = vld [vmem:[%s3 + $0x68] sm:$0xff]
    %v162 = vld [vmem:[%s3 + $0x70] sm:$0xff]
    %v163 = vld [vmem:[%s3 + $0x78] sm:$0xff]
    %v164 = vld [vmem:[%s3 + $0x80] sm:$0xff]
    %v165 = vld [vmem:[%s3 + $0x88] sm:$0xff]
    %v166 = vld [vmem:[%s3 + $0x90] sm:$0xff]
    %v167 = vld [vmem:[%s3 + $0x98] sm:$0xff]
    %v168 = vld [vmem:[%s3 + $0xa0] sm:$0xff]
    %v169 = vld [vmem:[%s3 + $0xa8] sm:$0xff]
    %v170 = vld [vmem:[%s3 + $0xb0] sm:$0xff]
    %v171 = vld [vmem:[%s3 + $0xb8] sm:$0xff]
    %v172 = vld [vmem:[%s3 + $0xc0] sm:$0xff]
    %v173 = vld [vmem:[%s3 + $0xc8] sm:$0xff]
    %v174 = vld [vmem:[%s3 + $0xd0] sm:$0xff]
    %v175 = vld [vmem:[%s3 + $0xd8] sm:$0xff]
    %v176 = vld [vmem:[%s3 + $0xe0] sm:$0xff]
    %v177 = vld [vmem:[%s3 + $0xe8] sm:$0xff]
    %v178 = vld [vmem:[%s3 + $0xf0] sm:$0xff]
    %v179 = vld [vmem:[%s3 + $0xf8] sm:$0xff]
    %v180 = vld [vmem:[%s3 + $0x100] sm:$0xff]
    %v181 = vld [vmem:[%s3 + $0x108] sm:$0xff]
    %v182 = vld [vmem:[%s3 + $0x110] sm:$0xff]
    %v183 = vld [vmem:[%s3 + $0x118] sm:$0xff]
    %v184 = vld [vmem:[%s4] sm:$0x3]
    %v186 = vlaneseq
    %v187 = vshrl.u32 %v186, 7
    %v188 = vsub.s32 0, %v187
    %v189 = vrot.slane %v184, %v188
    %v190 = vlaneseq
    %v191 = vshrl.u32 %v190, 7
    %v192 = vsub.s32 1, %v191
    %v193 = vrot.slane %v184, %v192
    %vm196 = vcmask 130048
    %v198 = vsel %vm196, %v147, 0
    %200 = vmatprep.subr.mxu0 %v149
    %201 = vmatpush1.msra.mxu0 %v148
    %202 = vmatprep.subr.mxu0 %v151
    %203 = vmatpush1.msra.mxu0 %v150
    %204 = vmatprep.subr.mxu0 %v153
    %205 = vmatpush1.msra.mxu0 %v152
    %206 = vmatprep.subr.mxu0 %v155
    %207 = vmatpush1.msra.mxu0 %v154
    %208 = vmatprep.subr.mxu0 %v157
    %209 = vmatpush1.msra.mxu0 %v156
    %210 = vmatprep.subr.mxu0 %v159
    %211 = vmatpush1.msra.mxu0 %v158
    %212 = vmatprep.subr.mxu0 %v161
    %213 = vmatpush1.msra.mxu0 %v160
    %214 = vmatprep.subr.mxu0 %v163
    %215 = vmatpush1.msra.mxu0 %v162
    %216 = vmatprep.subr.mxu0 %v165
    %217 = vmatpush1.msra.mxu0 %v164
    %218 = vmatprep.subr.mxu0 %v167
    %219 = vmatpush1.msra.mxu0 %v166
    %220 = vmatprep.subr.mxu0 %v169
    %221 = vmatpush1.msra.mxu0 %v168
    %222 = vmatprep.subr.mxu0 %v171
    %223 = vmatpush1.msra.mxu0 %v170
    %224 = vmatprep.subr.mxu0 %v173
    %225 = vmatpush1.msra.mxu0 %v172
    %226 = vmatprep.subr.mxu0 %v175
    %227 = vmatpush1.msra.mxu0 %v174
    %228 = vmatprep.subr.mxu0 %v177
    %229 = vmatpush1.msra.mxu0 %v176
    %230 = vmatprep.subr.mxu0 %v179
    %231 = vmatpush1.msra.mxu0 %v178
    %232 = vmatprep.subr.mxu0 %v181
    %233 = vmatpush1.msra.mxu0 %v180
    %234 = vmatprep.subr.mxu0 %v183
    %235 = vmatpush1.msra.mxu0 %v182
    %236 = vmatprep.subr.mxu0 0.0
    %237 = vmatpush1.msra.mxu0 0.0
    %238 = vmatprep.subr.mxu0 0.0
    %239 = vmatpush1.msra.mxu0 0.0
    %240 = vmatprep.subr.mxu0 0.0
    %241 = vmatpush1.msra.mxu0 0.0
    %242 = vmatprep.subr.mxu0 0.0
    %243 = vmatpush1.msra.mxu0 0.0
    %244 = vmatprep.subr.mxu0 0.0
    %245 = vmatpush1.msra.mxu0 0.0
    %246 = vmatprep.subr.mxu0 0.0
    %247 = vmatpush1.msra.mxu0 0.0
    %248 = vmatprep.subr.mxu0 0.0
    %249 = vmatpush1.msra.mxu0 0.0
    %250 = vmatprep.subr.mxu0 0.0
    %251 = vmatpush1.msra.mxu0 0.0
    %252 = vmatprep.subr.mxu0 0.0
    %253 = vmatpush1.msra.mxu0 0.0
    %254 = vmatprep.subr.mxu0 0.0
    %255 = vmatpush1.msra.mxu0 0.0
    %256 = vmatprep.subr.mxu0 0.0
    %257 = vmatpush1.msra.mxu0 0.0
    %258 = vmatprep.subr.mxu0 0.0
    %259 = vmatpush1.msra.mxu0 0.0
    %260 = vmatprep.subr.mxu0 0.0
    %261 = vmatpush1.msra.mxu0 0.0
    %262 = vmatprep.subr.mxu0 0.0
    %263 = vmatpush1.msra.mxu0 0.0
    %264 = vmatprep.mubr.f32.mxu0 %v198
    %265 = vmatmul.mubr.f32.gmra.mrb[0].mxu0 %v146
    %v266 = vpop.f32.mrb[0].mxu0
    %v267 = vadd.f32 %v189, %v266
    %v268 = vpop.f32.mrb[0].mxu0
    %v269 = vadd.f32 %v193, %v268
    %270 = vdwg.mxu0
    %v271 = vmax.f32 %v267, 0.0
    %v272 = vmax.f32 %v269, 0.0
    %v273 = vld [vmem:[%s5] sm:$0xff]
    %v274 = vld [vmem:[%s5 + $0x8] sm:$0xff]
    %v275 = vld [vmem:[%s5 + $0x10] sm:$0xff]
    %v276 = vld [vmem:[%s5 + $0x18] sm:$0xff]
    %v277 = vld [vmem:[%s5 + $0x20] sm:$0xff]
    %v278 = vld [vmem:[%s5 + $0x28] sm:$0xff]
    %v279 = vld [vmem:[%s5 + $0x30] sm:$0xff]
    %v280 = vld [vmem:[%s5 + $0x38] sm:$0xff]
    %v281 = vld [vmem:[%s5 + $0x40] sm:$0xff]
    %v282 = vld [vmem:[%s5 + $0x48] sm:$0xff]
    %v283 = vld [vmem:[%s5 + $0x50] sm:$0xff]
    %v284 = vld [vmem:[%s5 + $0x58] sm:$0xff]
    %v285 = vld [vmem:[%s5 + $0x60] sm:$0xff]
    %v286 = vld [vmem:[%s5 + $0x68] sm:$0xff]
    %v287 = vld [vmem:[%s5 + $0x70] sm:$0xff]
    %v288 = vld [vmem:[%s5 + $0x78] sm:$0xff]
    %v289 = vld [vmem:[%s5 + $0x80] sm:$0xff]
    %v290 = vld [vmem:[%s5 + $0x88] sm:$0xff]
    %v291 = vld [vmem:[%s5 + $0x90] sm:$0xff]
    %v292 = vld [vmem:[%s5 + $0x98] sm:$0xff]
    %v293 = vld [vmem:[%s5 + $0xa0] sm:$0xff]
    %v294 = vld [vmem:[%s5 + $0xa8] sm:$0xff]
    %v295 = vld [vmem:[%s5 + $0xb0] sm:$0xff]
    %v296 = vld [vmem:[%s5 + $0xb8] sm:$0xff]
    %v297 = vld [vmem:[%s5 + $0xc0] sm:$0xff]
    %v298 = vld [vmem:[%s5 + $0xc8] sm:$0xff]
    %v299 = vld [vmem:[%s5 + $0xd0] sm:$0xff]
    %v300 = vld [vmem:[%s5 + $0xd8] sm:$0xff]
    %v301 = vld [vmem:[%s6] sm:$0x1]
    %v303 = vlaneseq
    %v304 = vshrl.u32 %v303, 7
    %v305 = vsub.s32 0, %v304
    %v306 = vrot.slane %v301, %v305
    %vm308 = vcmask 785408
    %v310 = vsel %vm308, %v272, 0
    %312 = vmatprep.subr.mxu0 0.0
    %313 = vmatpush1.msra.mxu0 %v273
    %314 = vmatprep.subr.mxu0 0.0
    %315 = vmatpush1.msra.mxu0 %v274
    %316 = vmatprep.subr.mxu0 0.0
    %317 = vmatpush1.msra.mxu0 %v275
    %318 = vmatprep.subr.mxu0 0.0
    %319 = vmatpush1.msra.mxu0 %v276
    %320 = vmatprep.subr.mxu0 0.0
    %321 = vmatpush1.msra.mxu0 %v277
    %322 = vmatprep.subr.mxu0 0.0
    %323 = vmatpush1.msra.mxu0 %v278
    %324 = vmatprep.subr.mxu0 0.0
    %325 = vmatpush1.msra.mxu0 %v279
    %326 = vmatprep.subr.mxu0 0.0
    %327 = vmatpush1.msra.mxu0 %v280
    %328 = vmatprep.subr.mxu0 0.0
    %329 = vmatpush1.msra.mxu0 %v281
    %330 = vmatprep.subr.mxu0 0.0
    %331 = vmatpush1.msra.mxu0 %v282
    %332 = vmatprep.subr.mxu0 0.0
    %333 = vmatpush1.msra.mxu0 %v283
    %334 = vmatprep.subr.mxu0 0.0
    %335 = vmatpush1.msra.mxu0 %v284
    %336 = vmatprep.subr.mxu0 0.0
    %337 = vmatpush1.msra.mxu0 %v285
    %338 = vmatprep.subr.mxu0 0.0
    %339 = vmatpush1.msra.mxu0 %v286
    %340 = vmatprep.subr.mxu0 0.0
    %341 = vmatpush1.msra.mxu0 %v287
    %342 = vmatprep.subr.mxu0 0.0
    %343 = vmatpush1.msra.mxu0 %v288
    %344 = vmatprep.subr.mxu0 0.0
    %345 = vmatpush1.msra.mxu0 %v289
    %346 = vmatprep.subr.mxu0 0.0
    %347 = vmatpush1.msra.mxu0 %v290
    %348 = vmatprep.subr.mxu0 0.0
    %349 = vmatpush1.msra.mxu0 %v291
    %350 = vmatprep.subr.mxu0 0.0
    %351 = vmatpush1.msra.mxu0 %v292
    %352 = vmatprep.subr.mxu0 0.0
    %353 = vmatpush1.msra.mxu0 %v293
    %354 = vmatprep.subr.mxu0 0.0
    %355 = vmatpush1.msra.mxu0 %v294
    %356 = vmatprep.subr.mxu0 0.0
    %357 = vmatpush1.msra.mxu0 %v295
    %358 = vmatprep.subr.mxu0 0.0
    %359 = vmatpush1.msra.mxu0 %v296
    %360 = vmatprep.subr.mxu0 0.0
    %361 = vmatpush1.msra.mxu0 %v297
    %362 = vmatprep.subr.mxu0 0.0
    %363 = vmatpush1.msra.mxu0 %v298
    %364 = vmatprep.subr.mxu0 0.0
    %365 = vmatpush1.msra.mxu0 %v299
    %366 = vmatprep.subr.mxu0 0.0
    %367 = vmatpush1.msra.mxu0 %v300
    %368 = vmatprep.subr.mxu0 0.0
    %369 = vmatpush1.msra.mxu0 0.0
    %370 = vmatprep.subr.mxu0 0.0
    %371 = vmatpush1.msra.mxu0 0.0
    %372 = vmatprep.subr.mxu0 0.0
    %373 = vmatpush1.msra.mxu0 0.0
    %374 = vmatprep.subr.mxu0 0.0
    %375 = vmatpush1.msra.mxu0 0.0
    %376 = vmatprep.mubr.f32.mxu0 %v310
    %377 = vmatmul.mubr.f32.gmra.mrb[0].mxu0 %v271
    %v378 = vpop.f32.mrb[0].mxu0
    %v379 = vadd.f32 %v306, %v378
    %v380 = vpop.f32.mrb[0].mxu0
    %381 = vdwg.mxu0
    %v382 = vmax.f32 %v379, 0.0
    %v383 = vld [vmem:[%s7] sm:$0xff]
    %v384 = vld [vmem:[%s7 + $0x8] sm:$0xff]
    %v385 = vld [vmem:[%s7 + $0x10] sm:$0xff]
    %v386 = vld [vmem:[%s7 + $0x18] sm:$0xff]
    %v387 = vld [vmem:[%s7 + $0x20] sm:$0xff]
    %v388 = vld [vmem:[%s7 + $0x28] sm:$0xff]
    %v389 = vld [vmem:[%s7 + $0x30] sm:$0xff]
    %v390 = vld [vmem:[%s7 + $0x38] sm:$0xff]
    %v391 = vld [vmem:[%s8] sm:$0x1]
    %v393 = vlaneseq
    %v394 = vshrl.u32 %v393, 7
    %v395 = vsub.s32 0, %v394
    %v396 = vrot.slane %v391, %v395
    %vm398 = vcmask 523264
    %v400 = vsel %vm398, %v382, 0
    %402 = vmatprep.subr.mxu0 0.0
    %403 = vmatpush1.msra.mxu0 %v383
    %404 = vmatprep.subr.mxu0 0.0
    %405 = vmatpush1.msra.mxu0 %v384
    %406 = vmatprep.subr.mxu0 0.0
    %407 = vmatpush1.msra.mxu0 %v385
    %408 = vmatprep.subr.mxu0 0.0
    %409 = vmatpush1.msra.mxu0 %v386
    %410 = vmatprep.subr.mxu0 0.0
    %411 = vmatpush1.msra.mxu0 %v387
    %412 = vmatprep.subr.mxu0 0.0
    %413 = vmatpush1.msra.mxu0 %v388
    %414 = vmatprep.subr.mxu0 0.0
    %415 = vmatpush1.msra.mxu0 %v389
    %416 = vmatprep.subr.mxu0 0.0
    %417 = vmatpush1.msra.mxu0 %v390
    %418 = vmatprep.subr.mxu0 0.0
    %419 = vmatpush1.msra.mxu0 0.0
    %420 = vmatprep.subr.mxu0 0.0
    %421 = vmatpush1.msra.mxu0 0.0
    %422 = vmatprep.subr.mxu0 0.0
    %423 = vmatpush1.msra.mxu0 0.0
    %424 = vmatprep.subr.mxu0 0.0
    %425 = vmatpush1.msra.mxu0 0.0
    %426 = vmatprep.subr.mxu0 0.0
    %427 = vmatpush1.msra.mxu0 0.0
    %428 = vmatprep.subr.mxu0 0.0
    %429 = vmatpush1.msra.mxu0 0.0
    %430 = vmatprep.subr.mxu0 0.0
    %431 = vmatpush1.msra.mxu0 0.0
    %432 = vmatprep.subr.mxu0 0.0
    %433 = vmatpush1.msra.mxu0 0.0
    %434 = vmatprep.subr.mxu0 0.0
    %435 = vmatpush1.msra.mxu0 0.0
    %436 = vmatprep.subr.mxu0 0.0
    %437 = vmatpush1.msra.mxu0 0.0
    %438 = vmatprep.subr.mxu0 0.0
    %439 = vmatpush1.msra.mxu0 0.0
    %440 = vmatprep.subr.mxu0 0.0
    %441 = vmatpush1.msra.mxu0 0.0
    %442 = vmatprep.subr.mxu0 0.0
    %443 = vmatpush1.msra.mxu0 0.0
    %444 = vmatprep.subr.mxu0 0.0
    %445 = vmatpush1.msra.mxu0 0.0
    %446 = vmatprep.subr.mxu0 0.0
    %447 = vmatpush1.msra.mxu0 0.0
    %448 = vmatprep.subr.mxu0 0.0
    %449 = vmatpush1.msra.mxu0 0.0
    %450 = vmatprep.subr.mxu0 0.0
    %451 = vmatpush1.msra.mxu0 0.0
    %452 = vmatprep.subr.mxu0 0.0
    %453 = vmatpush1.msra.mxu0 0.0
    %454 = vmatprep.subr.mxu0 0.0
    %455 = vmatpush1.msra.mxu0 0.0
    %456 = vmatprep.subr.mxu0 0.0
    %457 = vmatpush1.msra.mxu0 0.0
    %458 = vmatprep.subr.mxu0 0.0
    %459 = vmatpush1.msra.mxu0 0.0
    %460 = vmatprep.subr.mxu0 0.0
    %461 = vmatpush1.msra.mxu0 0.0
    %462 = vmatprep.subr.mxu0 0.0
    %463 = vmatpush1.msra.mxu0 0.0
    %464 = vmatprep.subr.mxu0 0.0
    %465 = vmatpush1.msra.mxu0 0.0
    %466 = vmatprep.mubr.f32.mxu0 0.0
    %467 = vmatmul.mubr.f32.gmra.mrb[0].mxu0 %v400
    %v468 = vpop.f32.mrb[0].mxu0
    %v469 = vadd.f32 %v396, %v468
    %v470 = vpop.f32.mrb[0].mxu0
    %471 = vdwg.mxu0
    %472 = vst [vmem:[#allocation5] sm:$0xff] %v469
    // Predicated region
    $region42: #{tpu_custom_call.1} parent=1 // pred_check
      _
    $region43: #{tpu_custom_call.1} parent=1 // pred_check_branch
      %474 = sbr.rel (0) target = $region45
    $region44: #{tpu_custom_call.1} parent=1 // pred_region
      %s476 = ssub.s32 128, 128
      %477 = vsyncadd [#allocation4], %s476
      %s479 = sshll.u32 [#allocation5], 4
      %s480 = int_to_ptr.vmem [resolvable:$true] %s479
      %482 = dma.vmem_to_hbm [thread:$0]  %s480, 128, %s9, [#allocation4]
    $region45: #{tpu_custom_call.1} parent=1 // pred_fallthru
      _
    // Predicated region
    $region46: #{tpu_custom_call.1} parent=1 // pred_check
      _
    $region47: #{tpu_custom_call.1} parent=1 // pred_check_branch
      %484 = sbr.rel (0) target = $region49
    $region48: #{tpu_custom_call.1} parent=1 // pred_region
      %485 = dma.done [#allocation4], 128
    $region49: #{tpu_custom_call.1} parent=1 // pred_fallthru
      _
    %486 = vsyncpa [#allocation3], 1
    %487 = vsyncpa [#allocation4], 1

</llo_original>
